<compile_context>
chip_gen: v7x
topology: tpu7x:2x2x1
jax: 0.10.0
libtpu: 0.0.40
codegen_flags: <defaults>
</compile_context>

<pallas_src>
import functools

import jax
import jax.numpy as jnp
from jax import lax
from jax.experimental import pallas as pl
from jax.experimental.pallas import tpu as pltpu


def _sentence_embed_kernel(h_ref, m_ref, w_ref, b_ref, o_ref, *, bf16_tanh):
    # h_ref: (TB, S, D) token hidden states (bf16 preferred, f32 accepted)
    # m_ref: (TB, S, 1) f32 mask already scaled by 1/clamp(sum(mask), 1e-9)
    # w_ref: (D, D) bf16, b_ref: (1, D) f32  synthetic encoder output layer
    # o_ref: (TB, D) f32 normalized sentence embeddings
    TB, S, D = h_ref.shape

    # --- synthetic encoder "last layer" (stand-in for AutoModel) ------------
    # One big MXU matmul over all TB*S tokens, f32 accumulation.
    h2d = h_ref[...].reshape(TB * S, D)
    if h2d.dtype != jnp.bfloat16:
        h2d = h2d.astype(jnp.bfloat16)          # cast right before the dot
    acc = jnp.dot(h2d, w_ref[...], preferred_element_type=jnp.float32)
    acc = acc + b_ref[...]
    if bf16_tanh:
        # v6e/v7x: bf16 EUP tanh (halves EUP time, kernel stays HBM-bound)
        x = jnp.tanh(acc.astype(jnp.bfloat16)).astype(jnp.float32)
    else:
        # v5e: no bf16 EUP
        x = jnp.tanh(acc)
    x = x.reshape(TB, S, D)

    # --- mean_pooling: sum(tok * mask, 1) / clamp(sum(mask), 1e-9) ----------
    # (1/denom already folded into m_ref) -> VPU multiply + sublane reduction.
    pooled = jnp.sum(x * m_ref[...], axis=1)                   # (TB, D) f32

    # --- torch.nn.functional.normalize(p=2, dim=1, eps=1e-12) ---------------
    sq = jnp.sum(pooled * pooled, axis=-1, keepdims=True)      # (TB, 1)
    o_ref[...] = pooled * lax.rsqrt(jnp.maximum(sq, 1e-24))


def _device_kind() -> str:
    try:
        return jax.devices()[0].device_kind.lower()
    except Exception:  # pragma: no cover
        return ""


def _default_tb(B, S, D, itemsize):
    # Target ~2 MiB of hidden streamed per grid step (mem-bound kernel; small
    # tiles are dominated by ~0.35 us per-step grid overhead).
    tb = max(8, (2 * 1024 * 1024) // (S * D * itemsize))
    tb = (tb // 8) * 8
    tb = min(tb, 1024)
    if tb >= B:
        return B                      # single block == full batch dim is legal
    return tb                         # multiple of 8 keeps (8,128) legality


def sentence_embedding(hidden, attention_mask, w, b, *, tb=None):
    """hidden: (B, S, D) bf16/f32 token embeddings, attention_mask: (B, S)."""
    B, S, D = hidden.shape
    if tb is None:
        tb = _default_tb(B, S, D, jnp.dtype(hidden.dtype).itemsize)
    tb = min(tb, B)
    n_blocks = pl.cdiv(B, tb)   # ragged last block handled by Pallas masking;
                                # pooling is per-row so garbage rows in a
                                # partial block cannot contaminate valid rows.

    kind = _device_kind()
    use_bf16_tanh = "v5" not in kind                  # v5e has no bf16 EUP
    if ("v5" in kind) or ("v6" in kind):
        vmem_limit = 100 * 1024 * 1024                # 128 MiB physical parts
    else:
        vmem_limit = 48 * 1024 * 1024                 # v7x: 64 MiB physical

    # Cheap XLA-side glue on small tensors only (never a pass over `hidden`):
    # fold the per-row reciprocal denominator into the mask, bf16 MXU weight.
    mask_f = attention_mask.astype(jnp.float32)                    # (B, S)
    inv_denom = 1.0 / jnp.maximum(jnp.sum(mask_f, axis=1, keepdims=True), 1e-9)
    mask_w = (mask_f * inv_denom)[..., None]                       # (B, S, 1)
    w_bf = w.astype(jnp.bfloat16)
    b2 = b.reshape(1, D).astype(jnp.float32)

    kernel = functools.partial(_sentence_embed_kernel, bf16_tanh=use_bf16_tanh)

    out = pl.pallas_call(
        kernel,
        out_shape=jax.ShapeDtypeStruct((B, D), jnp.float32),
        grid_spec=pltpu.PrefetchScalarGridSpec(
            num_scalar_prefetch=0,
            grid=(n_blocks,),
            in_specs=[
                pl.BlockSpec((tb, S, D), lambda i: (i, 0, 0)),   # hidden tile
                pl.BlockSpec((tb, S, 1), lambda i: (i, 0, 0)),   # scaled mask
                # grid-invariant weight/bias: constant index_map -> fetched once
                pl.BlockSpec((D, D), lambda i: (0, 0)),
                pl.BlockSpec((1, D), lambda i: (0, 0)),
            ],
            out_specs=pl.BlockSpec((tb, D), lambda i: (i, 0)),   # lane-dense
        ),
        compiler_params=pltpu.CompilerParams(
            dimension_semantics=("parallel",),        # megacore on v7x
            vmem_limit_bytes=vmem_limit,
        ),
    )(hidden, mask_w, w_bf, b2)
    return out


def _reference(hidden, attention_mask, w, b, *, bf16_tanh):
    # Pure-JAX reference mirroring the kernel's numerics (bf16 MXU operands,
    # optional bf16 tanh) and the PyTorch forward semantics.
    h = hidden.astype(jnp.bfloat16)
    wf = w.astype(jnp.bfloat16)
    acc = jnp.einsum("bsd,de->bse", h, wf,
                     preferred_element_type=jnp.float32) + b.astype(jnp.float32)
    if bf16_tanh:
        x = jnp.tanh(acc.astype(jnp.bfloat16)).astype(jnp.float32)
    else:
        x = jnp.tanh(acc)
    m = attention_mask.astype(jnp.float32)[..., None]              # (B, S, 1)
    pooled = jnp.sum(x * m, axis=1) / jnp.maximum(jnp.sum(m, axis=1), 1e-9)
    nrm = jnp.linalg.norm(pooled, axis=1, keepdims=True)
    return pooled / jnp.maximum(nrm, 1e-12)


if __name__ == "__main__":
    B, S, D, V = 4, 16, 128, 50

    key = jax.random.PRNGKey(0)
    k_emb, k_ids, k_w, k_b = jax.random.split(key, 4)

    # deterministic synthetic parameters (embedding table kept in bf16 so the
    # encoder hidden states arrive in bf16 -- no wrapper-side cast pass)
    embed_table = (jax.random.normal(k_emb, (V, D), dtype=jnp.float32)
                   * 0.05).astype(jnp.bfloat16)
    w = jax.random.normal(k_w, (D, D), dtype=jnp.float32) * 0.1
    b = jax.random.normal(k_b, (D,), dtype=jnp.float32) * 0.01

    # deterministic synthetic tokenized batch (some rows have padding).
    # NOTE: rows with an all-zero attention mask would produce an all-zero
    # embedding (clamp semantics), matching the previous behavior.
    input_ids = jax.random.randint(k_ids, (B, S), 0, V)
    attention_mask = jnp.array(
        [[1] * S,
         [1] * 5 + [0] * (S - 5),
         [1] * 11 + [0] * (S - 11),
         [1] * S],
        dtype=jnp.int32,
    )

    # embedding lookup is glue (gather) in plain JAX
    hidden = embed_table[input_ids]                            # (B, S, D) bf16

    emb = sentence_embedding(hidden, attention_mask, w, b)
    jax.block_until_ready(emb)

    ref = _reference(hidden, attention_mask, w, b,
                     bf16_tanh="v5" not in _device_kind())
    assert emb.shape == (B, D)
    assert jnp.allclose(emb, ref, atol=2e-2, rtol=2e-2), (
        float(jnp.max(jnp.abs(emb - ref)))
    )

    print("KERNEL_OK")
</pallas_src>

<mosaic_0001>
module attributes {stable_mosaic.version = 11 : i64} {
  func.func @_sentence_embed_kernel(%arg0: i32, %arg1: memref<4x16x128xbf16, #tpu.memory_space<vmem>>, %arg2: memref<4x16x1xf32, #tpu.memory_space<vmem>>, %arg3: memref<128x128xbf16, #tpu.memory_space<vmem>>, %arg4: memref<1x128xf32, #tpu.memory_space<vmem>>, %arg5: memref<4x128xf32, #tpu.memory_space<vmem>>) attributes {dimension_semantics = [#tpu.dimension_semantics<parallel>], iteration_bounds = array<i64: 1>, scalar_prefetch = 0 : i64, scratch_operands = 0 : i64, tpu.core_type = #tpu.core_type<tc>, window_params = [{transform_indices = @transform_0, window_bounds = array<i64: 4, 16, 128>}, {transform_indices = @transform_1, window_bounds = array<i64: 4, 16, 1>}, {pipeline_mode = #tpu.pipeline_mode<synchronous>, transform_indices = @transform_2, window_bounds = array<i64: 128, 128>}, {pipeline_mode = #tpu.pipeline_mode<synchronous>, transform_indices = @transform_3, window_bounds = array<i64: 1, 128>}, {transform_indices = @transform_4, window_bounds = array<i64: 4, 128>}]} {
    %c0 = arith.constant 0 : index
    %c0_0 = arith.constant 0 : index
    %c0_1 = arith.constant 0 : index
    %0 = vector.load %arg1[%c0, %c0_0, %c0_1] : memref<4x16x128xbf16, #tpu.memory_space<vmem>>, vector<4x16x128xbf16>
    %1 = vector.shape_cast %0 : vector<4x16x128xbf16> to vector<64x128xbf16>
    %c0_2 = arith.constant 0 : index
    %c0_3 = arith.constant 0 : index
    %2 = vector.load %arg3[%c0_2, %c0_3] : memref<128x128xbf16, #tpu.memory_space<vmem>>, vector<128x128xbf16>
    %cst = arith.constant dense<0.000000e+00> : vector<64x128xf32>
    %3 = tpu.matmul %1, %2, %cst {dimension_numbers = #tpu.dot_dimension_numbers<[1], [0], [0], [1], [0, 0, 1, 1], [], []>} : vector<64x128xbf16>, vector<128x128xbf16>, vector<64x128xf32> -> vector<64x128xf32>
    %c0_4 = arith.constant 0 : index
    %c0_5 = arith.constant 0 : index
    %4 = vector.load %arg4[%c0_4, %c0_5] : memref<1x128xf32, #tpu.memory_space<vmem>>, vector<1x128xf32>
    %5 = vector.broadcast %4 : vector<1x128xf32> to vector<64x128xf32>
    %6 = arith.addf %3, %5 : vector<64x128xf32>
    %7 = arith.truncf %6 : vector<64x128xf32> to vector<64x128xbf16>
    %8 = math.tanh %7 : vector<64x128xbf16>
    %9 = arith.extf %8 : vector<64x128xbf16> to vector<64x128xf32>
    %10 = vector.shape_cast %9 : vector<64x128xf32> to vector<4x16x128xf32>
    %c0_6 = arith.constant 0 : index
    %c0_7 = arith.constant 0 : index
    %c0_8 = arith.constant 0 : index
    %11 = vector.load %arg2[%c0_6, %c0_7, %c0_8] : memref<4x16x1xf32, #tpu.memory_space<vmem>>, vector<4x16x1xf32>
    %12 = vector.broadcast %11 : vector<4x16x1xf32> to vector<4x16x128xf32>
    %13 = arith.mulf %10, %12 : vector<4x16x128xf32>
    %cst_9 = arith.constant dense<0.000000e+00> : vector<4x128xf32>
    %14 = vector.multi_reduction <add>, %13, %cst_9 [1] : vector<4x16x128xf32> to vector<4x128xf32>
    %15 = arith.mulf %14, %14 : vector<4x128xf32>
    %cst_10 = arith.constant dense<0.000000e+00> : vector<4xf32>
    %16 = vector.multi_reduction <add>, %15, %cst_10 [1] : vector<4x128xf32> to vector<4xf32>
    %17 = vector.shape_cast %16 : vector<4xf32> to vector<4x1xf32>
    %cst_11 = arith.constant 1.000000e-24 : f32
    %18 = vector.broadcast %cst_11 : f32 to vector<4x1xf32>
    %19 = arith.maximumf %17, %18 : vector<4x1xf32>
    %20 = math.rsqrt %19 : vector<4x1xf32>
    %21 = vector.broadcast %20 : vector<4x1xf32> to vector<4x128xf32>
    %22 = arith.mulf %14, %21 : vector<4x128xf32>
    %c0_12 = arith.constant 0 : index
    %c0_13 = arith.constant 0 : index
    %23 = vector.load %arg5[%c0_12, %c0_13] : memref<4x128xf32, #tpu.memory_space<vmem>>, vector<4x128xf32>
    tpu.vector_store %arg5[%c0_12, %c0_13], %22 {strides = array<i32>} : memref<4x128xf32, #tpu.memory_space<vmem>>, vector<4x128xf32>,
    return
  }
  func.func @transform_0(%arg0: i32) -> (i32, i32, i32) {
    %c0_i32 = arith.constant 0 : i32
    %c0_i32_0 = arith.constant 0 : i32
    %c0_i32_1 = arith.constant 0 : i32
    return %arg0, %c0_i32, %c0_i32_0 : i32, i32, i32
  }
  func.func @transform_1(%arg0: i32) -> (i32, i32, i32) {
    %c0_i32 = arith.constant 0 : i32
    %c0_i32_0 = arith.constant 0 : i32
    %c0_i32_1 = arith.constant 0 : i32
    return %arg0, %c0_i32, %c0_i32_0 : i32, i32, i32
  }
  func.func @transform_2(%arg0: i32) -> (i32, i32) {
    %c0_i32 = arith.constant 0 : i32
    %c0_i32_0 = arith.constant 0 : i32
    %c0_i32_1 = arith.constant 0 : i32
    return %c0_i32, %c0_i32_0 : i32, i32
  }
  func.func @transform_3(%arg0: i32) -> (i32, i32) {
    %c0_i32 = arith.constant 0 : i32
    %c0_i32_0 = arith.constant 0 : i32
    %c0_i32_1 = arith.constant 0 : i32
    return %c0_i32, %c0_i32_0 : i32, i32
  }
  func.func @transform_4(%arg0: i32) -> (i32, i32) {
    %c0_i32 = arith.constant 0 : i32
    %c0_i32_0 = arith.constant 0 : i32
    return %arg0, %c0_i32 : i32, i32
  }
}

</mosaic_0001>

<llo_original>
// kernel: tpu_custom_call.1
$region0: #{tpu_custom_call.1}
  #allocation0 [shape = 'u32[]', space=smem, size = 0x4, offset = 0x4, fixed_abs, tag = 'smem constant byte address 0x4 - core index']
  #allocation1 [shape = 'u32[144,128]{1,0:T(1,128)}', space=vmem, size = 0x12000, scoped, tag = 'internal scratch']
  %s0 = inlined_call_operand.hbm [shape: bf16[4,16,128], index: 0, kind: input, shape index: {}]
  %s1 = inlined_call_operand.vmem [shape: f32[4,16,1], index: 1, kind: input, shape index: {}]
  %s2 = inlined_call_operand.vmem [shape: bf16[128,128], index: 2, kind: input, shape index: {}]
  %s3 = inlined_call_operand.vmem [shape: f32[1,128], index: 3, kind: input, shape index: {}]
  %s4 = inlined_call_operand.hbm [shape: f32[4,128], index: 4, kind: output, shape index: {}]
  %s5 = sld [smem:[#allocation0]]
  $region30: #{tpu_custom_call.1} parent=0
    _
  %s7 = ssub.s32 1, %s5
  %s8 = scalar_select 0, %s7, %s5
  $region1: #{tpu_custom_call.1} parent=0
    #allocation2 [shape = 'u8[16384]{0}', space=vmem, size = 0x4000, scoped, tag = 'input window, operand 0, single buffered']
    #allocation3 [shape = 's32[1]{0}', space=sflag, size = 0x4, scoped, tag = 'scoped memory for tpu_custom_call.1']
    #allocation4 [shape = 's32[1]{0}', space=sflag, size = 0x4, scoped, tag = 'scoped memory for tpu_custom_call.1']
    #allocation5 [shape = 'u8[2048]{0}', space=vmem, size = 0x800, scoped, tag = 'output window, operand 0, single buffered']
    %9 = vsyncpa [#allocation3], 0
    %10 = vsyncpa [#allocation4], 0
    // Predicated region
    $region2: #{tpu_custom_call.1} parent=1 // pred_check
      _
    $region3: #{tpu_custom_call.1} parent=1 // pred_check_branch
      %12 = sbr.rel (0) target = $region5
    $region4: #{tpu_custom_call.1} parent=1 // pred_region
      %s14 = ssub.s32 512, 512
      %15 = vsyncadd [#allocation3], %s14
      %s16 = sshll.u32 [#allocation2], 4
      %s17 = int_to_ptr.vmem [resolvable:$true] %s16
      %22 = dma.hbm_to_vmem [thread:$0]  %s0, 512, %s17, [#allocation3], 64, 64, 4
    $region5: #{tpu_custom_call.1} parent=1 // pred_fallthru
      _
    // Predicated region
    $region6: #{tpu_custom_call.1} parent=1 // pred_check
      _
    $region7: #{tpu_custom_call.1} parent=1 // pred_check_branch
      %24 = sbr.rel (0) target = $region9
    $region8: #{tpu_custom_call.1} parent=1 // pred_region
      _
    $region9: #{tpu_custom_call.1} parent=1 // pred_fallthru
      _
    // Predicated region
    $region10: #{tpu_custom_call.1} parent=1 // pred_check
      _
    $region11: #{tpu_custom_call.1} parent=1 // pred_check_branch
      %26 = sbr.rel (0) target = $region13
    $region12: #{tpu_custom_call.1} parent=1 // pred_region
      _
    $region13: #{tpu_custom_call.1} parent=1 // pred_fallthru
      _
    // Predicated region
    $region14: #{tpu_custom_call.1} parent=1 // pred_check
      _
    $region15: #{tpu_custom_call.1} parent=1 // pred_check_branch
      %28 = sbr.rel (0) target = $region17
    $region16: #{tpu_custom_call.1} parent=1 // pred_region
      _
    $region17: #{tpu_custom_call.1} parent=1 // pred_fallthru
      _
    // Predicated region
    $region18: #{tpu_custom_call.1} parent=1 // pred_check
      _
    $region19: #{tpu_custom_call.1} parent=1 // pred_check_branch
      %30 = sbr.rel (0) target = $region21
    $region20: #{tpu_custom_call.1} parent=1 // pred_region
      %31 = dma.done [#allocation3], 512
    $region21: #{tpu_custom_call.1} parent=1 // pred_fallthru
      _
    %v33 = vld [vmem:[#allocation2] sm:$0xf]
    %v34 = vld [vmem:[#allocation2 + $0x4] sm:$0xf]
    %v35 = vld [vmem:[#allocation2 + $0x8] sm:$0xf]
    %v36 = vld [vmem:[#allocation2 + $0xc] sm:$0xf]
    %v37 = vld [vmem:[#allocation2 + $0x10] sm:$0xf]
    %v38 = vld [vmem:[#allocation2 + $0x14] sm:$0xf]
    %v39 = vld [vmem:[#allocation2 + $0x18] sm:$0xf]
    %v40 = vld [vmem:[#allocation2 + $0x1c] sm:$0xf]
    %v41 = vld [vmem:[%s2] sm:$0xf]
    %v42 = vld [vmem:[%s2 + $0x4] sm:$0xf]
    %v43 = vld [vmem:[%s2 + $0x8] sm:$0xf]
    %v44 = vld [vmem:[%s2 + $0xc] sm:$0xf]
    %v45 = vld [vmem:[%s2 + $0x10] sm:$0xf]
    %v46 = vld [vmem:[%s2 + $0x14] sm:$0xf]
    %v47 = vld [vmem:[%s2 + $0x18] sm:$0xf]
    %v48 = vld [vmem:[%s2 + $0x1c] sm:$0xf]
    %v49 = vld [vmem:[%s2 + $0x20] sm:$0xf]
    %v50 = vld [vmem:[%s2 + $0x24] sm:$0xf]
    %v51 = vld [vmem:[%s2 + $0x28] sm:$0xf]
    %v52 = vld [vmem:[%s2 + $0x2c] sm:$0xf]
    %v53 = vld [vmem:[%s2 + $0x30] sm:$0xf]
    %v54 = vld [vmem:[%s2 + $0x34] sm:$0xf]
    %v55 = vld [vmem:[%s2 + $0x38] sm:$0xf]
    %v56 = vld [vmem:[%s2 + $0x3c] sm:$0xf]
    %v57 = vld [vmem:[%s3] sm:$0x1]
    %v59 = vlaneseq
    %v60 = vshrl.u32 %v59, 7
    %v61 = vsub.s32 0, %v60
    %v62 = vrot.slane %v57, %v61
    %v72 = vunpack.c.l.b16 %v33
    %v73 = vunpack.c.l.b16 %v34
    %v74 = vunpack.c.l.b16 %v35
    %v75 = vunpack.c.l.b16 %v36
    %v76 = vunpack.c.l.b16 %v37
    %v77 = vunpack.c.l.b16 %v38
    %v78 = vunpack.c.l.b16 %v39
    %v79 = vunpack.c.l.b16 %v40
    %v80 = vpack.c.b16 %v73, %v72
    %v81 = vpack.c.b16 %v75, %v74
    %v82 = vpack.c.b16 %v77, %v76
    %v83 = vpack.c.b16 %v79, %v78
    %v104 = vunpack.c.l.b16 %v41
    %v105 = vunpack.c.l.b16 %v42
    %v106 = vunpack.c.l.b16 %v43
    %v107 = vunpack.c.l.b16 %v44
    %v108 = vunpack.c.l.b16 %v45
    %v109 = vunpack.c.l.b16 %v46
    %v110 = vunpack.c.l.b16 %v47
    %v111 = vunpack.c.l.b16 %v48
    %v112 = vunpack.c.l.b16 %v49
    %v113 = vunpack.c.l.b16 %v50
    %v114 = vunpack.c.l.b16 %v51
    %v115 = vunpack.c.l.b16 %v52
    %v116 = vunpack.c.l.b16 %v53
    %v117 = vunpack.c.l.b16 %v54
    %v118 = vunpack.c.l.b16 %v55
    %v119 = vunpack.c.l.b16 %v56
    %v120 = vpack.c.b16 %v105, %v104
    %v121 = vpack.c.b16 %v107, %v106
    %v122 = vpack.c.b16 %v109, %v108
    %v123 = vpack.c.b16 %v111, %v110
    %v124 = vpack.c.b16 %v113, %v112
    %v125 = vpack.c.b16 %v115, %v114
    %v126 = vpack.c.b16 %v117, %v116
    %v127 = vpack.c.b16 %v119, %v118
    %136 = vmatprep.subr.bf16.mxu0 0
    %137 = vmatpush1.bf16.msra.mxu0 %v120
    %138 = vmatprep.subr.bf16.mxu0 0
    %139 = vmatpush1.bf16.msra.mxu0 %v121
    %140 = vmatprep.subr.bf16.mxu0 0
    %141 = vmatpush1.bf16.msra.mxu0 %v122
    %142 = vmatprep.subr.bf16.mxu0 0
    %143 = vmatpush1.bf16.msra.mxu0 %v123
    %144 = vmatprep.subr.bf16.mxu0 0
    %145 = vmatpush1.bf16.msra.mxu0 %v124
    %146 = vmatprep.subr.bf16.mxu0 0
    %147 = vmatpush1.bf16.msra.mxu0 %v125
    %148 = vmatprep.subr.bf16.mxu0 0
    %149 = vmatpush1.bf16.msra.mxu0 %v126
    %150 = vmatprep.subr.bf16.mxu0 0
    %151 = vmatpush1.bf16.msra.mxu0 %v127
    %152 = vmatprep.subr.bf16.mxu0 0
    %153 = vmatpush1.bf16.msra.mxu0 0
    %154 = vmatprep.subr.bf16.mxu0 0
    %155 = vmatpush1.bf16.msra.mxu0 0
    %156 = vmatprep.subr.bf16.mxu0 0
    %157 = vmatpush1.bf16.msra.mxu0 0
    %158 = vmatprep.subr.bf16.mxu0 0
    %159 = vmatpush1.bf16.msra.mxu0 0
    %160 = vmatprep.subr.bf16.mxu0 0
    %161 = vmatpush1.bf16.msra.mxu0 0
    %162 = vmatprep.subr.bf16.mxu0 0
    %163 = vmatpush1.bf16.msra.mxu0 0
    %164 = vmatprep.subr.bf16.mxu0 0
    %165 = vmatpush1.bf16.msra.mxu0 0
    %166 = vmatprep.subr.bf16.mxu0 0
    %167 = vmatpush1.bf16.msra.mxu0 0
    %168 = vmatprep.mubr.bf16.mxu0 0
    %169 = vmatmul.mubr.bf16.gmra.mrb[0].mxu0 %v80
    %v170 = vpop.f32.mrb[0].mxu0
    %v171 = vadd.f32 %v62, %v170
    %v172 = vpop.f32.mrb[0].mxu0
    %v173 = vpop.f32.mrb[0].mxu0
    %v174 = vadd.f32 %v62, %v173
    %v175 = vpop.f32.mrb[0].mxu0
    %176 = vmatprep.mubr.bf16.mxu0 0
    %177 = vmatmul.mubr.bf16.gmra.mrb[0].mxu0 %v81
    %v178 = vpop.f32.mrb[0].mxu0
    %v179 = vadd.f32 %v62, %v178
    %v180 = vpop.f32.mrb[0].mxu0
    %v181 = vpop.f32.mrb[0].mxu0
    %v182 = vadd.f32 %v62, %v181
    %v183 = vpop.f32.mrb[0].mxu0
    %184 = vmatprep.mubr.bf16.mxu0 0
    %185 = vmatmul.mubr.bf16.gmra.mrb[0].mxu0 %v82
    %v186 = vpop.f32.mrb[0].mxu0
    %v187 = vadd.f32 %v62, %v186
    %v188 = vpop.f32.mrb[0].mxu0
    %v189 = vpop.f32.mrb[0].mxu0
    %v190 = vadd.f32 %v62, %v189
    %v191 = vpop.f32.mrb[0].mxu0
    %192 = vmatprep.mubr.bf16.mxu0 0
    %193 = vmatmul.mubr.bf16.gmra.mrb[0].mxu0 %v83
    %v194 = vpop.f32.mrb[0].mxu0
    %v195 = vadd.f32 %v62, %v194
    %v196 = vpop.f32.mrb[0].mxu0
    %v197 = vpop.f32.mrb[0].mxu0
    %v198 = vadd.f32 %v62, %v197
    %v199 = vpop.f32.mrb[0].mxu0
    %200 = vdwg.mxu0
    %v201 = vpack.c.bf16 %v174, %v171
    %v202 = vpack.c.bf16 %v182, %v179
    %v203 = vpack.c.bf16 %v190, %v187
    %v204 = vpack.c.bf16 %v198, %v195
    %v205 = vtanh.bf16.pop %v201
    %v206 = vtanh.bf16.pop %v202
    %v207 = vtanh.bf16.pop %v203
    %v208 = vtanh.bf16.pop %v204
    %v209 = vunpack.c.l.bf16 %v205
    %v210 = vunpack.c.h.bf16 %v205
    %v211 = vunpack.c.l.bf16 %v206
    %v212 = vunpack.c.h.bf16 %v206
    %v213 = vunpack.c.l.bf16 %v207
    %v214 = vunpack.c.h.bf16 %v207
    %v215 = vunpack.c.l.bf16 %v208
    %v216 = vunpack.c.h.bf16 %v208
    %v217 = vld [vmem:[%s1] sm:$0xff]
    %v218 = vld [vmem:[%s1 + $0x8] sm:$0xff]
    %v219 = vld [vmem:[%s1 + $0x10] sm:$0xff]
    %v220 = vld [vmem:[%s1 + $0x18] sm:$0xff]
    %v221 = vld [vmem:[%s1 + $0x20] sm:$0xff]
    %v222 = vld [vmem:[%s1 + $0x28] sm:$0xff]
    %v223 = vld [vmem:[%s1 + $0x30] sm:$0xff]
    %v224 = vld [vmem:[%s1 + $0x38] sm:$0xff]
    %226 = vset.pattern.permute.xlu0 0
    %227 = vperm.xlu0 %226, %v217
    %v228 = vpop.permute.xlu0 %227
    %231 = vset.pattern.permute.xlu0 0
    %232 = vperm.xlu0 %231, %v218
    %v233 = vpop.permute.xlu0 %232
    %236 = vset.pattern.permute.xlu0 0
    %237 = vperm.xlu0 %236, %v219
    %v238 = vpop.permute.xlu0 %237
    %241 = vset.pattern.permute.xlu0 0
    %242 = vperm.xlu0 %241, %v220
    %v243 = vpop.permute.xlu0 %242
    %246 = vset.pattern.permute.xlu0 0
    %247 = vperm.xlu0 %246, %v221
    %v248 = vpop.permute.xlu0 %247
    %251 = vset.pattern.permute.xlu0 0
    %252 = vperm.xlu0 %251, %v222
    %v253 = vpop.permute.xlu0 %252
    %256 = vset.pattern.permute.xlu0 0
    %257 = vperm.xlu0 %256, %v223
    %v258 = vpop.permute.xlu0 %257
    %261 = vset.pattern.permute.xlu0 0
    %262 = vperm.xlu0 %261, %v224
    %v263 = vpop.permute.xlu0 %262
    %v265 = vmul.f32 %v209, %v228
    %v266 = vmul.f32 %v210, %v233
    %v267 = vmul.f32 %v211, %v238
    %v268 = vmul.f32 %v212, %v243
    %v269 = vmul.f32 %v213, %v248
    %v270 = vmul.f32 %v214, %v253
    %v271 = vmul.f32 %v215, %v258
    %v272 = vmul.f32 %v216, %v263
    %v273 = vadd.f32 %v265, %v266
    %v274 = vrot.slane %v273, 4
    %v275 = vadd.f32 %v273, %v274
    %v276 = vrot.slane %v275, 2
    %v277 = vadd.f32 %v275, %v276
    %v278 = vrot.slane %v277, 1
    %v279 = vadd.f32 %v277, %v278
    %v280 = vadd.f32 %v267, %v268
    %v281 = vrot.slane %v280, 4
    %v282 = vadd.f32 %v280, %v281
    %v283 = vrot.slane %v282, 2
    %v284 = vadd.f32 %v282, %v283
    %v285 = vrot.slane %v284, 1
    %v286 = vadd.f32 %v284, %v285
    %v287 = vadd.f32 %v269, %v270
    %v288 = vrot.slane %v287, 4
    %v289 = vadd.f32 %v287, %v288
    %v290 = vrot.slane %v289, 2
    %v291 = vadd.f32 %v289, %v290
    %v292 = vrot.slane %v291, 1
    %v293 = vadd.f32 %v291, %v292
    %v294 = vadd.f32 %v271, %v272
    %v295 = vrot.slane %v294, 4
    %v296 = vadd.f32 %v294, %v295
    %v297 = vrot.slane %v296, 2
    %v298 = vadd.f32 %v296, %v297
    %v299 = vrot.slane %v298, 1
    %v300 = vadd.f32 %v298, %v299
    %v301 = vmul.f32 %v279, %v279
    %v302 = vmul.f32 %v286, %v286
    %v303 = vmul.f32 %v293, %v293
    %v304 = vmul.f32 %v300, %v300
    %vm309 = vcmask 1041409
    %v310 = vsel %vm309, %v302, %v301
    %vm311 = vcmask 1042434
    %v312 = vsel %vm311, %v303, %v310
    %vm313 = vcmask 1043459
    %v314 = vsel %vm313, %v304, %v312
    %vm316 = vcmask 1043456
    %v317 = vsel %vm316, %v314, 0.0
    %318 = vadd.xlane.f32.xlu0 %v317
    %v319 = vpop.xlane.xlu0 %318
    %v320 = vmax.f32 %v319, 1e-24
    %v321 = vrsqrt.pop %v320
    %v323 = vrot.slane %v321, 1
    %v324 = vrot.slane %v321, 2
    %v325 = vrot.slane %v321, 3
    %v330 = vmul.f32 %v279, %v321
    %v331 = vmul.f32 %v286, %v323
    %v332 = vmul.f32 %v293, %v324
    %v333 = vmul.f32 %v300, %v325
    %v338 = vrot.slane %v331, 7
    %v339 = vsel %vm309, %v338, %v330
    %v340 = vrot.slane %v332, 6
    %v341 = vsel %vm311, %v340, %v339
    %v342 = vrot.slane %v333, 5
    %v343 = vsel %vm313, %v342, %v341
    %345 = vst [vmem:[#allocation5] sm:$0xf] %v343
    // Predicated region
    $region22: #{tpu_custom_call.1} parent=1 // pred_check
      _
    $region23: #{tpu_custom_call.1} parent=1 // pred_check_branch
      %347 = sbr.rel (0) target = $region25
    $region24: #{tpu_custom_call.1} parent=1 // pred_region
      %s349 = ssub.s32 64, 64
      %350 = vsyncadd [#allocation4], %s349
      %s352 = sshll.u32 [#allocation5], 4
      %s353 = int_to_ptr.vmem [resolvable:$true] %s352
      %355 = dma.vmem_to_hbm [thread:$0]  %s353, 64, %s4, [#allocation4]
    $region25: #{tpu_custom_call.1} parent=1 // pred_fallthru
      _
    // Predicated region
    $region26: #{tpu_custom_call.1} parent=1 // pred_check
      _
    $region27: #{tpu_custom_call.1} parent=1 // pred_check_branch
      %357 = sbr.rel (0) target = $region29
    $region28: #{tpu_custom_call.1} parent=1 // pred_region
      %358 = dma.done [#allocation4], 64
    $region29: #{tpu_custom_call.1} parent=1 // pred_fallthru
      _
    %359 = vsyncpa [#allocation3], 1
    %360 = vsyncpa [#allocation4], 1

</llo_original>
